<compile_context>
chip_gen: v7x
topology: tpu7x:2x2x1
jax: 0.10.0
libtpu: 0.0.40
codegen_flags: <defaults>
</compile_context>

<pallas_src>
import functools

import jax
import jax.numpy as jnp
from jax import lax
from jax.experimental import pallas as pl
from jax.experimental.pallas import tpu as pltpu


_TB = 4096      # max batch lanes per grid step (multiple of _CHUNK)
_CHUNK = 512    # lanes per in-kernel sub-chunk (bounds the live [H, chunk] slab)


def _round_up(x, m):
    return (x + m - 1) // m * m


def _fused_mlp_kernel(uid_ref, bid_ref, vt_ref, w_ref, w2_ref, b2_ref, o_ref,
                      *, book_offset, vt_row, bias_row, chunk):
    # uid_ref / bid_ref : [1, TB] int32     vt_ref : [1, TB] f32
    # w_ref  : [H, K_pad] folded fc1 weight (VMEM-resident)
    # w2_ref : [1, H]     fc2 weight row     b2_ref : [1, 1]
    # o_ref  : [1, TB]    lane-dense output block
    k_pad = w_ref.shape[1]
    n_chunks = o_ref.shape[1] // chunk
    f32 = jnp.float32

    def body(c, carry):
        start = pl.multiple_of(c * chunk, chunk)
        sl = pl.ds(start, chunk)
        uid = uid_ref[:, sl]                          # [1, chunk] int32
        bid = bid_ref[:, sl]                          # [1, chunk] int32
        vt = vt_ref[:, sl]                            # [1, chunk] f32

        # Selector matrix M[K_pad, chunk] (VPU):
        #   user-id row -> 1, book-id row -> 1, view_time row -> vt, bias row -> 1,
        #   all other (padding) rows -> 0, so that W_all @ M == fc1(x) + b1.
        row = lax.broadcasted_iota(jnp.int32, (k_pad, chunk), 0)
        m = jnp.logical_or(row == uid, row == bid + book_offset).astype(f32)
        m = m + (row == vt_row).astype(f32) * vt
        m = m + (row == bias_row).astype(f32)

        h = jnp.dot(w_ref[...], m, preferred_element_type=f32)    # [H, chunk]  MXU
        h = jnp.maximum(h, 0.0)                                    # relu (VPU)
        o = jnp.dot(w2_ref[...], h, preferred_element_type=f32)   # [1, chunk]  MXU
        o_ref[:, sl] = o + b2_ref[...]
        return carry

    lax.fori_loop(0, n_chunks, body, 0, unroll=True)


def init_params(key, num_users, num_books, embedding_dim, hidden=128):
    k_ue, k_be, k_w1, k_b1, k_w2, k_b2 = jax.random.split(key, 6)
    in_dim = 2 * embedding_dim + 1
    bound1 = 1.0 / jnp.sqrt(in_dim)
    bound2 = 1.0 / jnp.sqrt(hidden)
    return {
        # nn.Embedding layout [num, E], N(0,1) init.
        "user_embedding": jax.random.normal(k_ue, (num_users, embedding_dim), jnp.float32),
        "book_embedding": jax.random.normal(k_be, (num_books, embedding_dim), jnp.float32),
        # nn.Linear layouts.
        "fc1_w": jax.random.uniform(k_w1, (hidden, in_dim), jnp.float32, -bound1, bound1),
        "fc1_b": jax.random.uniform(k_b1, (hidden,), jnp.float32, -bound1, bound1),
        "fc2_w": jax.random.uniform(k_w2, (1, hidden), jnp.float32, -bound2, bound2),
        "fc2_b": jax.random.uniform(k_b2, (1,), jnp.float32, -bound2, bound2),
    }


@jax.jit
def recommendation_forward(params, user_id, book_id, view_time):
    E = params["user_embedding"].shape[1]
    H = params["fc1_w"].shape[0]
    num_users = params["user_embedding"].shape[0]
    num_books = params["book_embedding"].shape[0]
    B = user_id.shape[0]

    # Fold the embedding tables through fc1 (tiny [H,E]x[E,V] matmuls, done
    # once per call under jit). Columns: user vocab | book vocab | view_time | bias | 0-pad.
    fc1_w = params["fc1_w"]
    wu = fc1_w[:, :E] @ params["user_embedding"].T              # [H, num_users]
    wb = fc1_w[:, E:2 * E] @ params["book_embedding"].T         # [H, num_books]
    k = num_users + num_books + 2
    k_pad = _round_up(k, 8)
    w_all = jnp.concatenate(
        [wu, wb, fc1_w[:, 2 * E:2 * E + 1], params["fc1_b"][:, None],
         jnp.zeros((H, k_pad - k), jnp.float32)], axis=1)       # [H, k_pad]

    vt_row = num_users + num_books
    bias_row = vt_row + 1

    # Batch tiling: pad only the cheap 1-D inputs.  Keep >= 2 grid steps when
    # possible so v7x's 2 TensorCores both get work; tiles stay multiples of _CHUNK.
    b_pad = _round_up(B, _CHUNK)
    tb = min(_TB, max(_CHUNK, _round_up((b_pad + 1) // 2, _CHUNK)))
    b_pad = _round_up(b_pad, tb)
    pad = b_pad - B

    uid = jnp.pad(user_id.astype(jnp.int32), (0, pad))[None, :]       # [1, b_pad]
    bid = jnp.pad(book_id.astype(jnp.int32), (0, pad))[None, :]       # [1, b_pad]
    vt = jnp.pad(view_time.astype(jnp.float32), (0, pad))[None, :]    # [1, b_pad]

    kernel = functools.partial(
        _fused_mlp_kernel,
        book_offset=num_users, vt_row=vt_row, bias_row=bias_row, chunk=_CHUNK)

    grid = (b_pad // tb,)
    out = pl.pallas_call(
        kernel,
        out_shape=jax.ShapeDtypeStruct((1, b_pad), jnp.float32),
        grid=grid,
        in_specs=[
            pl.BlockSpec((1, tb), lambda i: (0, i)),        # user ids   (batch-tiled)
            pl.BlockSpec((1, tb), lambda i: (0, i)),        # book ids   (batch-tiled)
            pl.BlockSpec((1, tb), lambda i: (0, i)),        # view_time  (batch-tiled)
            pl.BlockSpec((H, k_pad), lambda i: (0, 0)),     # folded fc1 weight (VMEM-resident)
            pl.BlockSpec((1, H), lambda i: (0, 0)),         # fc2 row           (VMEM-resident)
            pl.BlockSpec((1, 1), lambda i: (0, 0)),         # fc2 bias          (VMEM-resident)
        ],
        out_specs=pl.BlockSpec((1, tb), lambda i: (0, i)),  # lane-dense output
        compiler_params=pltpu.CompilerParams(
            dimension_semantics=("parallel",),
            vmem_limit_bytes=32 * 1024 * 1024,
        ),
    )(uid, bid, vt, w_all, params["fc2_w"], params["fc2_b"].reshape(1, 1))

    return out[0, :B][:, None]                                        # [B, 1]


def _reference_forward(params, user_id, book_id, view_time):
    # Pure-JAX mirror of the PyTorch module (unfolded math).
    u = params["user_embedding"][user_id]                             # [B, E]
    b = params["book_embedding"][book_id]                             # [B, E]
    x = jnp.concatenate([u, b, view_time[:, None].astype(jnp.float32)], axis=-1)
    h = jnp.maximum(x @ params["fc1_w"].T + params["fc1_b"], 0.0)
    return h @ params["fc2_w"].T + params["fc2_b"]                    # [B, 1]


if __name__ == "__main__":
    num_users, num_books, embedding_dim = 50, 60, 16

    key = jax.random.PRNGKey(0)
    k_params, k_data = jax.random.split(key)
    params = init_params(k_params, num_users, num_books, embedding_dim)

    # batch=8: single padded tile; batch=1500: 2-step grid (2 tiles of 1024).
    for batch in (8, 1500):
        ku, kb, kt = jax.random.split(jax.random.fold_in(k_data, batch), 3)
        user_id = jax.random.randint(ku, (batch,), 0, num_users, dtype=jnp.int32)
        book_id = jax.random.randint(kb, (batch,), 0, num_books, dtype=jnp.int32)
        view_time = jax.random.uniform(kt, (batch,), jnp.float32, minval=0.0, maxval=10.0)

        out = recommendation_forward(params, user_id, book_id, view_time)
        out = jax.block_until_ready(out)

        ref = _reference_forward(params, user_id, book_id, view_time)
        assert out.shape == (batch, 1), out.shape
        assert jnp.allclose(out, ref, atol=1e-3, rtol=1e-3), (
            "mismatch vs reference", batch, float(jnp.max(jnp.abs(out - ref))))

    print("KERNEL_OK")
</pallas_src>

<mosaic_0001>
module attributes {stable_mosaic.version = 11 : i64} {
  func.func @_fused_mlp_kernel(%arg0: i32, %arg1: memref<1x512xi32, #tpu.memory_space<vmem>>, %arg2: memref<1x512xi32, #tpu.memory_space<vmem>>, %arg3: memref<1x512xf32, #tpu.memory_space<vmem>>, %arg4: memref<128x112xf32, #tpu.memory_space<vmem>>, %arg5: memref<1x128xf32, #tpu.memory_space<vmem>>, %arg6: memref<1x1xf32, #tpu.memory_space<vmem>>, %arg7: memref<1x512xf32, #tpu.memory_space<vmem>>) attributes {dimension_semantics = [#tpu.dimension_semantics<parallel>], iteration_bounds = array<i64: 1>, scalar_prefetch = 0 : i64, scratch_operands = 0 : i64, tpu.core_type = #tpu.core_type<tc>, window_params = [{transform_indices = @transform_0, window_bounds = array<i64: 1, 512>}, {transform_indices = @transform_1, window_bounds = array<i64: 1, 512>}, {transform_indices = @transform_2, window_bounds = array<i64: 1, 512>}, {pipeline_mode = #tpu.pipeline_mode<synchronous>, transform_indices = @transform_3, window_bounds = array<i64: 128, 112>}, {pipeline_mode = #tpu.pipeline_mode<synchronous>, transform_indices = @transform_4, window_bounds = array<i64: 1, 128>}, {pipeline_mode = #tpu.pipeline_mode<synchronous>, transform_indices = @transform_5, window_bounds = array<i64: 1, 1>}, {transform_indices = @transform_6, window_bounds = array<i64: 1, 512>}]} {
    %c0_i32 = arith.constant 0 : i32
    %c512_i32 = arith.constant 512 : i32
    %0 = arith.muli %c0_i32, %c512_i32 : i32
    %1 = tpu.assume_multiple %0, 512 : i32
    %c0 = arith.constant 0 : index
    %2 = arith.index_cast %1 : i32 to index
    %3 = vector.load %arg1[%c0, %2] : memref<1x512xi32, #tpu.memory_space<vmem>>, vector<1x512xi32>
    %c0_0 = arith.constant 0 : index
    %4 = arith.index_cast %1 : i32 to index
    %5 = vector.load %arg2[%c0_0, %4] : memref<1x512xi32, #tpu.memory_space<vmem>>, vector<1x512xi32>
    %c0_1 = arith.constant 0 : index
    %6 = arith.index_cast %1 : i32 to index
    %7 = vector.load %arg3[%c0_1, %6] : memref<1x512xf32, #tpu.memory_space<vmem>>, vector<1x512xf32>
    %8 = tpu.iota {dimensions = array<i32: 0>} : vector<112x512xi32>
    %9 = vector.broadcast %3 : vector<1x512xi32> to vector<112x512xi32>
    %10 = arith.cmpi eq, %8, %9 : vector<112x512xi32>
    %c50_i32 = arith.constant 50 : i32
    %11 = vector.broadcast %c50_i32 : i32 to vector<1x512xi32>
    %12 = arith.addi %5, %11 : vector<1x512xi32>
    %13 = vector.broadcast %12 : vector<1x512xi32> to vector<112x512xi32>
    %14 = arith.cmpi eq, %8, %13 : vector<112x512xi32>
    %15 = arith.ori %10, %14 : vector<112x512xi1>
    %16 = arith.extui %15 : vector<112x512xi1> to vector<112x512xi32>
    %17 = arith.sitofp %16 : vector<112x512xi32> to vector<112x512xf32>
    %c110_i32 = arith.constant 110 : i32
    %18 = vector.broadcast %c110_i32 : i32 to vector<112x512xi32>
    %19 = arith.cmpi eq, %8, %18 : vector<112x512xi32>
    %20 = arith.extui %19 : vector<112x512xi1> to vector<112x512xi32>
    %21 = arith.sitofp %20 : vector<112x512xi32> to vector<112x512xf32>
    %22 = vector.broadcast %7 : vector<1x512xf32> to vector<112x512xf32>
    %23 = arith.mulf %21, %22 : vector<112x512xf32>
    %24 = arith.addf %17, %23 : vector<112x512xf32>
    %c111_i32 = arith.constant 111 : i32
    %25 = vector.broadcast %c111_i32 : i32 to vector<112x512xi32>
    %26 = arith.cmpi eq, %8, %25 : vector<112x512xi32>
    %27 = arith.extui %26 : vector<112x512xi1> to vector<112x512xi32>
    %28 = arith.sitofp %27 : vector<112x512xi32> to vector<112x512xf32>
    %29 = arith.addf %24, %28 : vector<112x512xf32>
    %c0_2 = arith.constant 0 : index
    %c0_3 = arith.constant 0 : index
    %30 = vector.load %arg4[%c0_2, %c0_3] : memref<128x112xf32, #tpu.memory_space<vmem>>, vector<128x112xf32>
    %cst = arith.constant dense<0.000000e+00> : vector<128x512xf32>
    %31 = tpu.matmul %30, %29, %cst {dimension_numbers = #tpu.dot_dimension_numbers<[1], [0], [0], [1], [0, 0, 1, 1], [], []>} : vector<128x112xf32>, vector<112x512xf32>, vector<128x512xf32> -> vector<128x512xf32>
    %cst_4 = arith.constant 0.000000e+00 : f32
    %32 = vector.broadcast %cst_4 : f32 to vector<128x512xf32>
    %33 = arith.maximumf %31, %32 : vector<128x512xf32>
    %c0_5 = arith.constant 0 : index
    %c0_6 = arith.constant 0 : index
    %34 = vector.load %arg5[%c0_5, %c0_6] : memref<1x128xf32, #tpu.memory_space<vmem>>, vector<1x128xf32>
    %cst_7 = arith.constant dense<0.000000e+00> : vector<1x512xf32>
    %35 = tpu.matmul %34, %33, %cst_7 {dimension_numbers = #tpu.dot_dimension_numbers<[1], [0], [0], [1], [0, 0, 1, 1], [], []>} : vector<1x128xf32>, vector<128x512xf32>, vector<1x512xf32> -> vector<1x512xf32>
    %c0_8 = arith.constant 0 : index
    %c0_9 = arith.constant 0 : index
    %36 = vector.load %arg6[%c0_8, %c0_9] : memref<1x1xf32, #tpu.memory_space<vmem>>, vector<1x1xf32>
    %37 = vector.broadcast %36 : vector<1x1xf32> to vector<1x512xf32>
    %38 = arith.addf %35, %37 : vector<1x512xf32>
    %c0_10 = arith.constant 0 : index
    %39 = arith.index_cast %1 : i32 to index
    %40 = vector.load %arg7[%c0_10, %39] : memref<1x512xf32, #tpu.memory_space<vmem>>, vector<1x512xf32>
    tpu.vector_store %arg7[%c0_10, %39], %38 {strides = array<i32>} : memref<1x512xf32, #tpu.memory_space<vmem>>, vector<1x512xf32>,
    %c1_i32 = arith.constant 1 : i32
    return
  }
  func.func @transform_0(%arg0: i32) -> (i32, i32) {
    %c0_i32 = arith.constant 0 : i32
    %c0_i32_0 = arith.constant 0 : i32
    return %c0_i32, %arg0 : i32, i32
  }
  func.func @transform_1(%arg0: i32) -> (i32, i32) {
    %c0_i32 = arith.constant 0 : i32
    %c0_i32_0 = arith.constant 0 : i32
    return %c0_i32, %arg0 : i32, i32
  }
  func.func @transform_2(%arg0: i32) -> (i32, i32) {
    %c0_i32 = arith.constant 0 : i32
    %c0_i32_0 = arith.constant 0 : i32
    return %c0_i32, %arg0 : i32, i32
  }
  func.func @transform_3(%arg0: i32) -> (i32, i32) {
    %c0_i32 = arith.constant 0 : i32
    %c0_i32_0 = arith.constant 0 : i32
    %c0_i32_1 = arith.constant 0 : i32
    return %c0_i32, %c0_i32_0 : i32, i32
  }
  func.func @transform_4(%arg0: i32) -> (i32, i32) {
    %c0_i32 = arith.constant 0 : i32
    %c0_i32_0 = arith.constant 0 : i32
    %c0_i32_1 = arith.constant 0 : i32
    return %c0_i32, %c0_i32_0 : i32, i32
  }
  func.func @transform_5(%arg0: i32) -> (i32, i32) {
    %c0_i32 = arith.constant 0 : i32
    %c0_i32_0 = arith.constant 0 : i32
    %c0_i32_1 = arith.constant 0 : i32
    return %c0_i32, %c0_i32_0 : i32, i32
  }
  func.func @transform_6(%arg0: i32) -> (i32, i32) {
    %c0_i32 = arith.constant 0 : i32
    %c0_i32_0 = arith.constant 0 : i32
    return %c0_i32, %arg0 : i32, i32
  }
}

</mosaic_0001>

<llo_original>
// kernel: recommendation_forward.1
$region0: #{recommendation_forward.1}
  #allocation0 [shape = 'u32[]', space=smem, size = 0x4, offset = 0x4, fixed_abs, tag = 'smem constant byte address 0x4 - core index']
  #allocation1 [shape = 'u32[144,128]{1,0:T(1,128)}', space=vmem, size = 0x12000, scoped, tag = 'internal scratch']
  #allocation2 [shape = 'f32[1,1]{1,0:T(1,128)S(1)}', space=vmem, size = 0x200, scoped, tag = 'scoped memory for recommendation_forward.1']
  %s0 = inlined_call_operand.vmem [shape: s32[1,512], index: 0, kind: input, shape index: {}]
  %s1 = inlined_call_operand.vmem [shape: s32[1,512], index: 1, kind: input, shape index: {}]
  %s2 = inlined_call_operand.vmem [shape: f32[1,512], index: 2, kind: input, shape index: {}]
  %s3 = inlined_call_operand.vmem [shape: f32[128,112], index: 3, kind: input, shape index: {}]
  %s4 = inlined_call_operand.vmem [shape: f32[1,128], index: 4, kind: input, shape index: {}]
  %s5 = inlined_call_operand.<no memory space> [shape: f32[1,1], index: 5, kind: input, shape index: {}]
  %s6 = inlined_call_operand.vmem [shape: f32[1,512], index: 6, kind: output, shape index: {}]
  %s7 = sld [smem:[#allocation0]]
  $region34: #{recommendation_forward.1} parent=0
    _
  %s9 = ssub.s32 1, %s7
  %s10 = scalar_select 0, %s9, %s7
  %v11 = vstv %s5
  %12 = vst [vmem:[#allocation2] sm:$0x1] %v11
  // Predicated region
  $region2: #{recommendation_forward.1} parent=0 // pred_check
    _
  $region3: #{recommendation_forward.1} parent=0 // pred_check_branch
    %14 = sbr.rel (0) target = $region5
  $region4: #{recommendation_forward.1} parent=0 // pred_region
    _
  $region5: #{recommendation_forward.1} parent=0 // pred_fallthru
    _
  // Predicated region
  $region6: #{recommendation_forward.1} parent=0 // pred_check
    _
  $region7: #{recommendation_forward.1} parent=0 // pred_check_branch
    %16 = sbr.rel (0) target = $region9
  $region8: #{recommendation_forward.1} parent=0 // pred_region
    _
  $region9: #{recommendation_forward.1} parent=0 // pred_fallthru
    _
  // Predicated region
  $region10: #{recommendation_forward.1} parent=0 // pred_check
    _
  $region11: #{recommendation_forward.1} parent=0 // pred_check_branch
    %18 = sbr.rel (0) target = $region13
  $region12: #{recommendation_forward.1} parent=0 // pred_region
    _
  $region13: #{recommendation_forward.1} parent=0 // pred_fallthru
    _
  // Predicated region
  $region14: #{recommendation_forward.1} parent=0 // pred_check
    _
  $region15: #{recommendation_forward.1} parent=0 // pred_check_branch
    %20 = sbr.rel (0) target = $region17
  $region16: #{recommendation_forward.1} parent=0 // pred_region
    _
  $region17: #{recommendation_forward.1} parent=0 // pred_fallthru
    _
  // Predicated region
  $region18: #{recommendation_forward.1} parent=0 // pred_check
    _
  $region19: #{recommendation_forward.1} parent=0 // pred_check_branch
    %22 = sbr.rel (0) target = $region21
  $region20: #{recommendation_forward.1} parent=0 // pred_region
    _
  $region21: #{recommendation_forward.1} parent=0 // pred_fallthru
    _
  // Predicated region
  $region22: #{recommendation_forward.1} parent=0 // pred_check
    _
  $region23: #{recommendation_forward.1} parent=0 // pred_check_branch
    %24 = sbr.rel (0) target = $region25
  $region24: #{recommendation_forward.1} parent=0 // pred_region
    _
  $region25: #{recommendation_forward.1} parent=0 // pred_fallthru
    _
  %v25 = vld [vmem:[%s0] sm:$0xf]
  %v26 = vld [vmem:[%s1] sm:$0xf]
  %v27 = vld [vmem:[%s2] sm:$0xf]
  %v28 = vlaneseq
  %v29 = vshrl.u32 %v28, 7
  %v30 = vadd.s32 %v29, 8
  %v31 = vadd.s32 %v29, 16
  %v32 = vadd.s32 %v29, 24
  %v33 = vadd.s32 %v29, 32
  %v34 = vadd.s32 %v29, 40
  %v35 = vadd.s32 %v29, 48
  %v36 = vadd.s32 %v29, 56
  %v37 = vadd.s32 %v29, 64
  %v38 = vadd.s32 %v29, 72
  %v39 = vadd.s32 %v29, 80
  %v40 = vadd.s32 %v29, 88
  %v41 = vadd.s32 %v29, 96
  %v42 = vadd.s32 %v29, 104
  %v43 = vlaneseq
  %v44 = vshrl.u32 %v43, 7
  %v45 = vsub.s32 0, %v44
  %v46 = vrot.slane %v25, %v45
  %v47 = vlaneseq
  %v48 = vshrl.u32 %v47, 7
  %v49 = vsub.s32 1, %v48
  %v50 = vrot.slane %v25, %v49
  %v51 = vlaneseq
  %v52 = vshrl.u32 %v51, 7
  %v53 = vsub.s32 2, %v52
  %v54 = vrot.slane %v25, %v53
  %v55 = vlaneseq
  %v56 = vshrl.u32 %v55, 7
  %v57 = vsub.s32 3, %v56
  %v58 = vrot.slane %v25, %v57
  %vm59 = vcmp.eq.s32.totalorder %v29, %v46
  %vm60 = vcmp.eq.s32.totalorder %v29, %v50
  %vm61 = vcmp.eq.s32.totalorder %v29, %v54
  %vm62 = vcmp.eq.s32.totalorder %v29, %v58
  %vm63 = vcmp.eq.s32.totalorder %v30, %v46
  %vm64 = vcmp.eq.s32.totalorder %v30, %v50
  %vm65 = vcmp.eq.s32.totalorder %v30, %v54
  %vm66 = vcmp.eq.s32.totalorder %v30, %v58
  %vm67 = vcmp.eq.s32.totalorder %v31, %v46
  %vm68 = vcmp.eq.s32.totalorder %v31, %v50
  %vm69 = vcmp.eq.s32.totalorder %v31, %v54
  %vm70 = vcmp.eq.s32.totalorder %v31, %v58
  %vm71 = vcmp.eq.s32.totalorder %v32, %v46
  %vm72 = vcmp.eq.s32.totalorder %v32, %v50
  %vm73 = vcmp.eq.s32.totalorder %v32, %v54
  %vm74 = vcmp.eq.s32.totalorder %v32, %v58
  %vm75 = vcmp.eq.s32.totalorder %v33, %v46
  %vm76 = vcmp.eq.s32.totalorder %v33, %v50
  %vm77 = vcmp.eq.s32.totalorder %v33, %v54
  %vm78 = vcmp.eq.s32.totalorder %v33, %v58
  %vm79 = vcmp.eq.s32.totalorder %v34, %v46
  %vm80 = vcmp.eq.s32.totalorder %v34, %v50
  %vm81 = vcmp.eq.s32.totalorder %v34, %v54
  %vm82 = vcmp.eq.s32.totalorder %v34, %v58
  %vm83 = vcmp.eq.s32.totalorder %v35, %v46
  %vm84 = vcmp.eq.s32.totalorder %v35, %v50
  %vm85 = vcmp.eq.s32.totalorder %v35, %v54
  %vm86 = vcmp.eq.s32.totalorder %v35, %v58
  %vm87 = vcmp.eq.s32.totalorder %v36, %v46
  %vm88 = vcmp.eq.s32.totalorder %v36, %v50
  %vm89 = vcmp.eq.s32.totalorder %v36, %v54
  %vm90 = vcmp.eq.s32.totalorder %v36, %v58
  %vm91 = vcmp.eq.s32.totalorder %v37, %v46
  %vm92 = vcmp.eq.s32.totalorder %v37, %v50
  %vm93 = vcmp.eq.s32.totalorder %v37, %v54
  %vm94 = vcmp.eq.s32.totalorder %v37, %v58
  %vm95 = vcmp.eq.s32.totalorder %v38, %v46
  %vm96 = vcmp.eq.s32.totalorder %v38, %v50
  %vm97 = vcmp.eq.s32.totalorder %v38, %v54
  %vm98 = vcmp.eq.s32.totalorder %v38, %v58
  %vm99 = vcmp.eq.s32.totalorder %v39, %v46
  %vm100 = vcmp.eq.s32.totalorder %v39, %v50
  %vm101 = vcmp.eq.s32.totalorder %v39, %v54
  %vm102 = vcmp.eq.s32.totalorder %v39, %v58
  %vm103 = vcmp.eq.s32.totalorder %v40, %v46
  %vm104 = vcmp.eq.s32.totalorder %v40, %v50
  %vm105 = vcmp.eq.s32.totalorder %v40, %v54
  %vm106 = vcmp.eq.s32.totalorder %v40, %v58
  %vm107 = vcmp.eq.s32.totalorder %v41, %v46
  %vm108 = vcmp.eq.s32.totalorder %v41, %v50
  %vm109 = vcmp.eq.s32.totalorder %v41, %v54
  %vm110 = vcmp.eq.s32.totalorder %v41, %v58
  %vm111 = vcmp.eq.s32.totalorder %v42, %v46
  %vm112 = vcmp.eq.s32.totalorder %v42, %v50
  %vm113 = vcmp.eq.s32.totalorder %v42, %v54
  %vm114 = vcmp.eq.s32.totalorder %v42, %v58
  %v115 = vadd.s32 %v26, 50
  %v116 = vlaneseq
  %v117 = vshrl.u32 %v116, 7
  %v118 = vsub.s32 0, %v117
  %v119 = vrot.slane %v115, %v118
  %v120 = vlaneseq
  %v121 = vshrl.u32 %v120, 7
  %v122 = vsub.s32 1, %v121
  %v123 = vrot.slane %v115, %v122
  %v124 = vlaneseq
  %v125 = vshrl.u32 %v124, 7
  %v126 = vsub.s32 2, %v125
  %v127 = vrot.slane %v115, %v126
  %v128 = vlaneseq
  %v129 = vshrl.u32 %v128, 7
  %v130 = vsub.s32 3, %v129
  %v131 = vrot.slane %v115, %v130
  %vm132 = vcmp.eq.s32.totalorder %v29, %v119
  %vm133 = vcmp.eq.s32.totalorder %v29, %v123
  %vm134 = vcmp.eq.s32.totalorder %v29, %v127
  %vm135 = vcmp.eq.s32.totalorder %v29, %v131
  %vm136 = vcmp.eq.s32.totalorder %v30, %v119
  %vm137 = vcmp.eq.s32.totalorder %v30, %v123
  %vm138 = vcmp.eq.s32.totalorder %v30, %v127
  %vm139 = vcmp.eq.s32.totalorder %v30, %v131
  %vm140 = vcmp.eq.s32.totalorder %v31, %v119
  %vm141 = vcmp.eq.s32.totalorder %v31, %v123
  %vm142 = vcmp.eq.s32.totalorder %v31, %v127
  %vm143 = vcmp.eq.s32.totalorder %v31, %v131
  %vm144 = vcmp.eq.s32.totalorder %v32, %v119
  %vm145 = vcmp.eq.s32.totalorder %v32, %v123
  %vm146 = vcmp.eq.s32.totalorder %v32, %v127
  %vm147 = vcmp.eq.s32.totalorder %v32, %v131
  %vm148 = vcmp.eq.s32.totalorder %v33, %v119
  %vm149 = vcmp.eq.s32.totalorder %v33, %v123
  %vm150 = vcmp.eq.s32.totalorder %v33, %v127
  %vm151 = vcmp.eq.s32.totalorder %v33, %v131
  %vm152 = vcmp.eq.s32.totalorder %v34, %v119
  %vm153 = vcmp.eq.s32.totalorder %v34, %v123
  %vm154 = vcmp.eq.s32.totalorder %v34, %v127
  %vm155 = vcmp.eq.s32.totalorder %v34, %v131
  %vm156 = vcmp.eq.s32.totalorder %v35, %v119
  %vm157 = vcmp.eq.s32.totalorder %v35, %v123
  %vm158 = vcmp.eq.s32.totalorder %v35, %v127
  %vm159 = vcmp.eq.s32.totalorder %v35, %v131
  %vm160 = vcmp.eq.s32.totalorder %v36, %v119
  %vm161 = vcmp.eq.s32.totalorder %v36, %v123
  %vm162 = vcmp.eq.s32.totalorder %v36, %v127
  %vm163 = vcmp.eq.s32.totalorder %v36, %v131
  %vm164 = vcmp.eq.s32.totalorder %v37, %v119
  %vm165 = vcmp.eq.s32.totalorder %v37, %v123
  %vm166 = vcmp.eq.s32.totalorder %v37, %v127
  %vm167 = vcmp.eq.s32.totalorder %v37, %v131
  %vm168 = vcmp.eq.s32.totalorder %v38, %v119
  %vm169 = vcmp.eq.s32.totalorder %v38, %v123
  %vm170 = vcmp.eq.s32.totalorder %v38, %v127
  %vm171 = vcmp.eq.s32.totalorder %v38, %v131
  %vm172 = vcmp.eq.s32.totalorder %v39, %v119
  %vm173 = vcmp.eq.s32.totalorder %v39, %v123
  %vm174 = vcmp.eq.s32.totalorder %v39, %v127
  %vm175 = vcmp.eq.s32.totalorder %v39, %v131
  %vm176 = vcmp.eq.s32.totalorder %v40, %v119
  %vm177 = vcmp.eq.s32.totalorder %v40, %v123
  %vm178 = vcmp.eq.s32.totalorder %v40, %v127
  %vm179 = vcmp.eq.s32.totalorder %v40, %v131
  %vm180 = vcmp.eq.s32.totalorder %v41, %v119
  %vm181 = vcmp.eq.s32.totalorder %v41, %v123
  %vm182 = vcmp.eq.s32.totalorder %v41, %v127
  %vm183 = vcmp.eq.s32.totalorder %v41, %v131
  %vm184 = vcmp.eq.s32.totalorder %v42, %v119
  %vm185 = vcmp.eq.s32.totalorder %v42, %v123
  %vm186 = vcmp.eq.s32.totalorder %v42, %v127
  %vm187 = vcmp.eq.s32.totalorder %v42, %v131
  %vm188 = vmor %vm59, %vm132
  %vm189 = vmor %vm60, %vm133
  %vm190 = vmor %vm61, %vm134
  %vm191 = vmor %vm62, %vm135
  %vm192 = vmor %vm63, %vm136
  %vm193 = vmor %vm64, %vm137
  %vm194 = vmor %vm65, %vm138
  %vm195 = vmor %vm66, %vm139
  %vm196 = vmor %vm67, %vm140
  %vm197 = vmor %vm68, %vm141
  %vm198 = vmor %vm69, %vm142
  %vm199 = vmor %vm70, %vm143
  %vm200 = vmor %vm71, %vm144
  %vm201 = vmor %vm72, %vm145
  %vm202 = vmor %vm73, %vm146
  %vm203 = vmor %vm74, %vm147
  %vm204 = vmor %vm75, %vm148
  %vm205 = vmor %vm76, %vm149
  %vm206 = vmor %vm77, %vm150
  %vm207 = vmor %vm78, %vm151
  %vm208 = vmor %vm79, %vm152
  %vm209 = vmor %vm80, %vm153
  %vm210 = vmor %vm81, %vm154
  %vm211 = vmor %vm82, %vm155
  %vm212 = vmor %vm83, %vm156
  %vm213 = vmor %vm84, %vm157
  %vm214 = vmor %vm85, %vm158
  %vm215 = vmor %vm86, %vm159
  %vm216 = vmor %vm87, %vm160
  %vm217 = vmor %vm88, %vm161
  %vm218 = vmor %vm89, %vm162
  %vm219 = vmor %vm90, %vm163
  %vm220 = vmor %vm91, %vm164
  %vm221 = vmor %vm92, %vm165
  %vm222 = vmor %vm93, %vm166
  %vm223 = vmor %vm94, %vm167
  %vm224 = vmor %vm95, %vm168
  %vm225 = vmor %vm96, %vm169
  %vm226 = vmor %vm97, %vm170
  %vm227 = vmor %vm98, %vm171
  %vm228 = vmor %vm99, %vm172
  %vm229 = vmor %vm100, %vm173
  %vm230 = vmor %vm101, %vm174
  %vm231 = vmor %vm102, %vm175
  %vm232 = vmor %vm103, %vm176
  %vm233 = vmor %vm104, %vm177
  %vm234 = vmor %vm105, %vm178
  %vm235 = vmor %vm106, %vm179
  %vm236 = vmor %vm107, %vm180
  %vm237 = vmor %vm108, %vm181
  %vm238 = vmor %vm109, %vm182
  %vm239 = vmor %vm110, %vm183
  %vm240 = vmor %vm111, %vm184
  %vm241 = vmor %vm112, %vm185
  %vm242 = vmor %vm113, %vm186
  %vm243 = vmor %vm114, %vm187
  %v244 = vsel %vm188, 1, 0
  %v245 = vsel %vm189, 1, 0
  %v246 = vsel %vm190, 1, 0
  %v247 = vsel %vm191, 1, 0
  %v248 = vsel %vm192, 1, 0
  %v249 = vsel %vm193, 1, 0
  %v250 = vsel %vm194, 1, 0
  %v251 = vsel %vm195, 1, 0
  %v252 = vsel %vm196, 1, 0
  %v253 = vsel %vm197, 1, 0
  %v254 = vsel %vm198, 1, 0
  %v255 = vsel %vm199, 1, 0
  %v256 = vsel %vm200, 1, 0
  %v257 = vsel %vm201, 1, 0
  %v258 = vsel %vm202, 1, 0
  %v259 = vsel %vm203, 1, 0
  %v260 = vsel %vm204, 1, 0
  %v261 = vsel %vm205, 1, 0
  %v262 = vsel %vm206, 1, 0
  %v263 = vsel %vm207, 1, 0
  %v264 = vsel %vm208, 1, 0
  %v265 = vsel %vm209, 1, 0
  %v266 = vsel %vm210, 1, 0
  %v267 = vsel %vm211, 1, 0
  %v268 = vsel %vm212, 1, 0
  %v269 = vsel %vm213, 1, 0
  %v270 = vsel %vm214, 1, 0
  %v271 = vsel %vm215, 1, 0
  %v272 = vsel %vm216, 1, 0
  %v273 = vsel %vm217, 1, 0
  %v274 = vsel %vm218, 1, 0
  %v275 = vsel %vm219, 1, 0
  %v276 = vsel %vm220, 1, 0
  %v277 = vsel %vm221, 1, 0
  %v278 = vsel %vm222, 1, 0
  %v279 = vsel %vm223, 1, 0
  %v280 = vsel %vm224, 1, 0
  %v281 = vsel %vm225, 1, 0
  %v282 = vsel %vm226, 1, 0
  %v283 = vsel %vm227, 1, 0
  %v284 = vsel %vm228, 1, 0
  %v285 = vsel %vm229, 1, 0
  %v286 = vsel %vm230, 1, 0
  %v287 = vsel %vm231, 1, 0
  %v288 = vsel %vm232, 1, 0
  %v289 = vsel %vm233, 1, 0
  %v290 = vsel %vm234, 1, 0
  %v291 = vsel %vm235, 1, 0
  %v292 = vsel %vm236, 1, 0
  %v293 = vsel %vm237, 1, 0
  %v294 = vsel %vm238, 1, 0
  %v295 = vsel %vm239, 1, 0
  %v296 = vsel %vm240, 1, 0
  %v297 = vsel %vm241, 1, 0
  %v298 = vsel %vm242, 1, 0
  %v299 = vsel %vm243, 1, 0
  %v300 = vcvt.s32.f32 %v244
  %v301 = vcvt.s32.f32 %v245
  %v302 = vcvt.s32.f32 %v246
  %v303 = vcvt.s32.f32 %v247
  %v304 = vcvt.s32.f32 %v248
  %v305 = vcvt.s32.f32 %v249
  %v306 = vcvt.s32.f32 %v250
  %v307 = vcvt.s32.f32 %v251
  %v308 = vcvt.s32.f32 %v252
  %v309 = vcvt.s32.f32 %v253
  %v310 = vcvt.s32.f32 %v254
  %v311 = vcvt.s32.f32 %v255
  %v312 = vcvt.s32.f32 %v256
  %v313 = vcvt.s32.f32 %v257
  %v314 = vcvt.s32.f32 %v258
  %v315 = vcvt.s32.f32 %v259
  %v316 = vcvt.s32.f32 %v260
  %v317 = vcvt.s32.f32 %v261
  %v318 = vcvt.s32.f32 %v262
  %v319 = vcvt.s32.f32 %v263
  %v320 = vcvt.s32.f32 %v264
  %v321 = vcvt.s32.f32 %v265
  %v322 = vcvt.s32.f32 %v266
  %v323 = vcvt.s32.f32 %v267
  %v324 = vcvt.s32.f32 %v268
  %v325 = vcvt.s32.f32 %v269
  %v326 = vcvt.s32.f32 %v270
  %v327 = vcvt.s32.f32 %v271
  %v328 = vcvt.s32.f32 %v272
  %v329 = vcvt.s32.f32 %v273
  %v330 = vcvt.s32.f32 %v274
  %v331 = vcvt.s32.f32 %v275
  %v332 = vcvt.s32.f32 %v276
  %v333 = vcvt.s32.f32 %v277
  %v334 = vcvt.s32.f32 %v278
  %v335 = vcvt.s32.f32 %v279
  %v336 = vcvt.s32.f32 %v280
  %v337 = vcvt.s32.f32 %v281
  %v338 = vcvt.s32.f32 %v282
  %v339 = vcvt.s32.f32 %v283
  %v340 = vcvt.s32.f32 %v284
  %v341 = vcvt.s32.f32 %v285
  %v342 = vcvt.s32.f32 %v286
  %v343 = vcvt.s32.f32 %v287
  %v344 = vcvt.s32.f32 %v288
  %v345 = vcvt.s32.f32 %v289
  %v346 = vcvt.s32.f32 %v290
  %v347 = vcvt.s32.f32 %v291
  %v348 = vcvt.s32.f32 %v292
  %v349 = vcvt.s32.f32 %v293
  %v350 = vcvt.s32.f32 %v294
  %v351 = vcvt.s32.f32 %v295
  %v352 = vcvt.s32.f32 %v296
  %v353 = vcvt.s32.f32 %v297
  %v354 = vcvt.s32.f32 %v298
  %v355 = vcvt.s32.f32 %v299
  %vm356 = vcmp.eq.s32.totalorder %v29, 110
  %vm357 = vcmp.eq.s32.totalorder %v30, 110
  %vm358 = vcmp.eq.s32.totalorder %v31, 110
  %vm359 = vcmp.eq.s32.totalorder %v32, 110
  %vm360 = vcmp.eq.s32.totalorder %v33, 110
  %vm361 = vcmp.eq.s32.totalorder %v34, 110
  %vm362 = vcmp.eq.s32.totalorder %v35, 110
  %vm363 = vcmp.eq.s32.totalorder %v36, 110
  %vm364 = vcmp.eq.s32.totalorder %v37, 110
  %vm365 = vcmp.eq.s32.totalorder %v38, 110
  %vm366 = vcmp.eq.s32.totalorder %v39, 110
  %vm367 = vcmp.eq.s32.totalorder %v40, 110
  %vm368 = vcmp.eq.s32.totalorder %v41, 110
  %vm369 = vcmp.eq.s32.totalorder %v42, 110
  %v370 = vsel %vm356, 1, 0
  %v371 = vsel %vm357, 1, 0
  %v372 = vsel %vm358, 1, 0
  %v373 = vsel %vm359, 1, 0
  %v374 = vsel %vm360, 1, 0
  %v375 = vsel %vm361, 1, 0
  %v376 = vsel %vm362, 1, 0
  %v377 = vsel %vm363, 1, 0
  %v378 = vsel %vm364, 1, 0
  %v379 = vsel %vm365, 1, 0
  %v380 = vsel %vm366, 1, 0
  %v381 = vsel %vm367, 1, 0
  %v382 = vsel %vm368, 1, 0
  %v383 = vsel %vm369, 1, 0
  %v384 = vcvt.s32.f32 %v370
  %v385 = vcvt.s32.f32 %v371
  %v386 = vcvt.s32.f32 %v372
  %v387 = vcvt.s32.f32 %v373
  %v388 = vcvt.s32.f32 %v374
  %v389 = vcvt.s32.f32 %v375
  %v390 = vcvt.s32.f32 %v376
  %v391 = vcvt.s32.f32 %v377
  %v392 = vcvt.s32.f32 %v378
  %v393 = vcvt.s32.f32 %v379
  %v394 = vcvt.s32.f32 %v380
  %v395 = vcvt.s32.f32 %v381
  %v396 = vcvt.s32.f32 %v382
  %v397 = vcvt.s32.f32 %v383
  %v399 = vlaneseq
  %v400 = vshrl.u32 %v399, 7
  %v401 = vsub.s32 0, %v400
  %v402 = vrot.slane %v27, %v401
  %v403 = vlaneseq
  %v404 = vshrl.u32 %v403, 7
  %v405 = vsub.s32 1, %v404
  %v406 = vrot.slane %v27, %v405
  %v407 = vlaneseq
  %v408 = vshrl.u32 %v407, 7
  %v409 = vsub.s32 2, %v408
  %v410 = vrot.slane %v27, %v409
  %v411 = vlaneseq
  %v412 = vshrl.u32 %v411, 7
  %v413 = vsub.s32 3, %v412
  %v414 = vrot.slane %v27, %v413
  %v419 = vmul.f32 %v384, %v402
  %v420 = vmul.f32 %v384, %v406
  %v421 = vmul.f32 %v384, %v410
  %v422 = vmul.f32 %v384, %v414
  %v423 = vmul.f32 %v385, %v402
  %v424 = vmul.f32 %v385, %v406
  %v425 = vmul.f32 %v385, %v410
  %v426 = vmul.f32 %v385, %v414
  %v427 = vmul.f32 %v386, %v402
  %v428 = vmul.f32 %v386, %v406
  %v429 = vmul.f32 %v386, %v410
  %v430 = vmul.f32 %v386, %v414
  %v431 = vmul.f32 %v387, %v402
  %v432 = vmul.f32 %v387, %v406
  %v433 = vmul.f32 %v387, %v410
  %v434 = vmul.f32 %v387, %v414
  %v435 = vmul.f32 %v388, %v402
  %v436 = vmul.f32 %v388, %v406
  %v437 = vmul.f32 %v388, %v410
  %v438 = vmul.f32 %v388, %v414
  %v439 = vmul.f32 %v389, %v402
  %v440 = vmul.f32 %v389, %v406
  %v441 = vmul.f32 %v389, %v410
  %v442 = vmul.f32 %v389, %v414
  %v443 = vmul.f32 %v390, %v402
  %v444 = vmul.f32 %v390, %v406
  %v445 = vmul.f32 %v390, %v410
  %v446 = vmul.f32 %v390, %v414
  %v447 = vmul.f32 %v391, %v402
  %v448 = vmul.f32 %v391, %v406
  %v449 = vmul.f32 %v391, %v410
  %v450 = vmul.f32 %v391, %v414
  %v451 = vmul.f32 %v392, %v402
  %v452 = vmul.f32 %v392, %v406
  %v453 = vmul.f32 %v392, %v410
  %v454 = vmul.f32 %v392, %v414
  %v455 = vmul.f32 %v393, %v402
  %v456 = vmul.f32 %v393, %v406
  %v457 = vmul.f32 %v393, %v410
  %v458 = vmul.f32 %v393, %v414
  %v459 = vmul.f32 %v394, %v402
  %v460 = vmul.f32 %v394, %v406
  %v461 = vmul.f32 %v394, %v410
  %v462 = vmul.f32 %v394, %v414
  %v463 = vmul.f32 %v395, %v402
  %v464 = vmul.f32 %v395, %v406
  %v465 = vmul.f32 %v395, %v410
  %v466 = vmul.f32 %v395, %v414
  %v467 = vmul.f32 %v396, %v402
  %v468 = vmul.f32 %v396, %v406
  %v469 = vmul.f32 %v396, %v410
  %v470 = vmul.f32 %v396, %v414
  %v471 = vmul.f32 %v397, %v402
  %v472 = vmul.f32 %v397, %v406
  %v473 = vmul.f32 %v397, %v410
  %v474 = vmul.f32 %v397, %v414
  %v475 = vadd.f32 %v300, %v419
  %v476 = vadd.f32 %v301, %v420
  %v477 = vadd.f32 %v302, %v421
  %v478 = vadd.f32 %v303, %v422
  %v479 = vadd.f32 %v304, %v423
  %v480 = vadd.f32 %v305, %v424
  %v481 = vadd.f32 %v306, %v425
  %v482 = vadd.f32 %v307, %v426
  %v483 = vadd.f32 %v308, %v427
  %v484 = vadd.f32 %v309, %v428
  %v485 = vadd.f32 %v310, %v429
  %v486 = vadd.f32 %v311, %v430
  %v487 = vadd.f32 %v312, %v431
  %v488 = vadd.f32 %v313, %v432
  %v489 = vadd.f32 %v314, %v433
  %v490 = vadd.f32 %v315, %v434
  %v491 = vadd.f32 %v316, %v435
  %v492 = vadd.f32 %v317, %v436
  %v493 = vadd.f32 %v318, %v437
  %v494 = vadd.f32 %v319, %v438
  %v495 = vadd.f32 %v320, %v439
  %v496 = vadd.f32 %v321, %v440
  %v497 = vadd.f32 %v322, %v441
  %v498 = vadd.f32 %v323, %v442
  %v499 = vadd.f32 %v324, %v443
  %v500 = vadd.f32 %v325, %v444
  %v501 = vadd.f32 %v326, %v445
  %v502 = vadd.f32 %v327, %v446
  %v503 = vadd.f32 %v328, %v447
  %v504 = vadd.f32 %v329, %v448
  %v505 = vadd.f32 %v330, %v449
  %v506 = vadd.f32 %v331, %v450
  %v507 = vadd.f32 %v332, %v451
  %v508 = vadd.f32 %v333, %v452
  %v509 = vadd.f32 %v334, %v453
  %v510 = vadd.f32 %v335, %v454
  %v511 = vadd.f32 %v336, %v455
  %v512 = vadd.f32 %v337, %v456
  %v513 = vadd.f32 %v338, %v457
  %v514 = vadd.f32 %v339, %v458
  %v515 = vadd.f32 %v340, %v459
  %v516 = vadd.f32 %v341, %v460
  %v517 = vadd.f32 %v342, %v461
  %v518 = vadd.f32 %v343, %v462
  %v519 = vadd.f32 %v344, %v463
  %v520 = vadd.f32 %v345, %v464
  %v521 = vadd.f32 %v346, %v465
  %v522 = vadd.f32 %v347, %v466
  %v523 = vadd.f32 %v348, %v467
  %v524 = vadd.f32 %v349, %v468
  %v525 = vadd.f32 %v350, %v469
  %v526 = vadd.f32 %v351, %v470
  %v527 = vadd.f32 %v352, %v471
  %v528 = vadd.f32 %v353, %v472
  %v529 = vadd.f32 %v354, %v473
  %v530 = vadd.f32 %v355, %v474
  %vm531 = vcmp.eq.s32.totalorder %v29, 111
  %vm532 = vcmp.eq.s32.totalorder %v30, 111
  %vm533 = vcmp.eq.s32.totalorder %v31, 111
  %vm534 = vcmp.eq.s32.totalorder %v32, 111
  %vm535 = vcmp.eq.s32.totalorder %v33, 111
  %vm536 = vcmp.eq.s32.totalorder %v34, 111
  %vm537 = vcmp.eq.s32.totalorder %v35, 111
  %vm538 = vcmp.eq.s32.totalorder %v36, 111
  %vm539 = vcmp.eq.s32.totalorder %v37, 111
  %vm540 = vcmp.eq.s32.totalorder %v38, 111
  %vm541 = vcmp.eq.s32.totalorder %v39, 111
  %vm542 = vcmp.eq.s32.totalorder %v40, 111
  %vm543 = vcmp.eq.s32.totalorder %v41, 111
  %vm544 = vcmp.eq.s32.totalorder %v42, 111
  %v545 = vsel %vm531, 1, 0
  %v546 = vsel %vm532, 1, 0
  %v547 = vsel %vm533, 1, 0
  %v548 = vsel %vm534, 1, 0
  %v549 = vsel %vm535, 1, 0
  %v550 = vsel %vm536, 1, 0
  %v551 = vsel %vm537, 1, 0
  %v552 = vsel %vm538, 1, 0
  %v553 = vsel %vm539, 1, 0
  %v554 = vsel %vm540, 1, 0
  %v555 = vsel %vm541, 1, 0
  %v556 = vsel %vm542, 1, 0
  %v557 = vsel %vm543, 1, 0
  %v558 = vsel %vm544, 1, 0
  %v559 = vcvt.s32.f32 %v545
  %v560 = vcvt.s32.f32 %v546
  %v561 = vcvt.s32.f32 %v547
  %v562 = vcvt.s32.f32 %v548
  %v563 = vcvt.s32.f32 %v549
  %v564 = vcvt.s32.f32 %v550
  %v565 = vcvt.s32.f32 %v551
  %v566 = vcvt.s32.f32 %v552
  %v567 = vcvt.s32.f32 %v553
  %v568 = vcvt.s32.f32 %v554
  %v569 = vcvt.s32.f32 %v555
  %v570 = vcvt.s32.f32 %v556
  %v571 = vcvt.s32.f32 %v557
  %v572 = vcvt.s32.f32 %v558
  %v573 = vadd.f32 %v475, %v559
  %v574 = vadd.f32 %v476, %v559
  %v575 = vadd.f32 %v477, %v559
  %v576 = vadd.f32 %v478, %v559
  %v577 = vadd.f32 %v479, %v560
  %v578 = vadd.f32 %v480, %v560
  %v579 = vadd.f32 %v481, %v560
  %v580 = vadd.f32 %v482, %v560
  %v581 = vadd.f32 %v483, %v561
  %v582 = vadd.f32 %v484, %v561
  %v583 = vadd.f32 %v485, %v561
  %v584 = vadd.f32 %v486, %v561
  %v585 = vadd.f32 %v487, %v562
  %v586 = vadd.f32 %v488, %v562
  %v587 = vadd.f32 %v489, %v562
  %v588 = vadd.f32 %v490, %v562
  %v589 = vadd.f32 %v491, %v563
  %v590 = vadd.f32 %v492, %v563
  %v591 = vadd.f32 %v493, %v563
  %v592 = vadd.f32 %v494, %v563
  %v593 = vadd.f32 %v495, %v564
  %v594 = vadd.f32 %v496, %v564
  %v595 = vadd.f32 %v497, %v564
  %v596 = vadd.f32 %v498, %v564
  %v597 = vadd.f32 %v499, %v565
  %v598 = vadd.f32 %v500, %v565
  %v599 = vadd.f32 %v501, %v565
  %v600 = vadd.f32 %v502, %v565
  %v601 = vadd.f32 %v503, %v566
  %v602 = vadd.f32 %v504, %v566
  %v603 = vadd.f32 %v505, %v566
  %v604 = vadd.f32 %v506, %v566
  %v605 = vadd.f32 %v507, %v567
  %v606 = vadd.f32 %v508, %v567
  %v607 = vadd.f32 %v509, %v567
  %v608 = vadd.f32 %v510, %v567
  %v609 = vadd.f32 %v511, %v568
  %v610 = vadd.f32 %v512, %v568
  %v611 = vadd.f32 %v513, %v568
  %v612 = vadd.f32 %v514, %v568
  %v613 = vadd.f32 %v515, %v569
  %v614 = vadd.f32 %v516, %v569
  %v615 = vadd.f32 %v517, %v569
  %v616 = vadd.f32 %v518, %v569
  %v617 = vadd.f32 %v519, %v570
  %v618 = vadd.f32 %v520, %v570
  %v619 = vadd.f32 %v521, %v570
  %v620 = vadd.f32 %v522, %v570
  %v621 = vadd.f32 %v523, %v571
  %v622 = vadd.f32 %v524, %v571
  %v623 = vadd.f32 %v525, %v571
  %v624 = vadd.f32 %v526, %v571
  %v625 = vadd.f32 %v527, %v572
  %v626 = vadd.f32 %v528, %v572
  %v627 = vadd.f32 %v529, %v572
  %v628 = vadd.f32 %v530, %v572
  %v629 = vld [vmem:[%s3] sm:$0xff]
  %v630 = vld [vmem:[%s3 + $0x8] sm:$0xff]
  %v631 = vld [vmem:[%s3 + $0x10] sm:$0xff]
  %v632 = vld [vmem:[%s3 + $0x18] sm:$0xff]
  %v633 = vld [vmem:[%s3 + $0x20] sm:$0xff]
  %v634 = vld [vmem:[%s3 + $0x28] sm:$0xff]
  %v635 = vld [vmem:[%s3 + $0x30] sm:$0xff]
  %v636 = vld [vmem:[%s3 + $0x38] sm:$0xff]
  %v637 = vld [vmem:[%s3 + $0x40] sm:$0xff]
  %v638 = vld [vmem:[%s3 + $0x48] sm:$0xff]
  %v639 = vld [vmem:[%s3 + $0x50] sm:$0xff]
  %v640 = vld [vmem:[%s3 + $0x58] sm:$0xff]
  %v641 = vld [vmem:[%s3 + $0x60] sm:$0xff]
  %v642 = vld [vmem:[%s3 + $0x68] sm:$0xff]
  %v643 = vld [vmem:[%s3 + $0x70] sm:$0xff]
  %v644 = vld [vmem:[%s3 + $0x78] sm:$0xff]
  %vm645 = vcmask 916480
  %v647 = vsel %vm645, %v629, 0
  %v650 = vsel %vm645, %v630, 0
  %v653 = vsel %vm645, %v631, 0
  %v656 = vsel %vm645, %v632, 0
  %v659 = vsel %vm645, %v633, 0
  %v662 = vsel %vm645, %v634, 0
  %v665 = vsel %vm645, %v635, 0
  %v668 = vsel %vm645, %v636, 0
  %v671 = vsel %vm645, %v637, 0
  %v674 = vsel %vm645, %v638, 0
  %v677 = vsel %vm645, %v639, 0
  %v680 = vsel %vm645, %v640, 0
  %v683 = vsel %vm645, %v641, 0
  %v686 = vsel %vm645, %v642, 0
  %v689 = vsel %vm645, %v643, 0
  %v692 = vsel %vm645, %v644, 0
  %694 = vmatprep.subr.mxu0 %v574
  %695 = vmatpush1.msra.mxu0 %v573
  %696 = vmatprep.subr.mxu0 %v578
  %697 = vmatpush1.msra.mxu0 %v577
  %698 = vmatprep.subr.mxu0 %v582
  %699 = vmatpush1.msra.mxu0 %v581
  %700 = vmatprep.subr.mxu0 %v586
  %701 = vmatpush1.msra.mxu0 %v585
  %702 = vmatprep.subr.mxu0 %v590
  %703 = vmatpush1.msra.mxu0 %v589
  %704 = vmatprep.subr.mxu0 %v594
  %705 = vmatpush1.msra.mxu0 %v593
  %706 = vmatprep.subr.mxu0 %v598
  %707 = vmatpush1.msra.mxu0 %v597
  %708 = vmatprep.subr.mxu0 %v602
  %709 = vmatpush1.msra.mxu0 %v601
  %710 = vmatprep.subr.mxu0 %v606
  %711 = vmatpush1.msra.mxu0 %v605
  %712 = vmatprep.subr.mxu0 %v610
  %713 = vmatpush1.msra.mxu0 %v609
  %714 = vmatprep.subr.mxu0 %v614
  %715 = vmatpush1.msra.mxu0 %v613
  %716 = vmatprep.subr.mxu0 %v618
  %717 = vmatpush1.msra.mxu0 %v617
  %718 = vmatprep.subr.mxu0 %v622
  %719 = vmatpush1.msra.mxu0 %v621
  %720 = vmatprep.subr.mxu0 %v626
  %721 = vmatpush1.msra.mxu0 %v625
  %722 = vmatprep.subr.mxu0 0.0
  %723 = vmatpush1.msra.mxu0 0.0
  %724 = vmatprep.subr.mxu0 0.0
  %725 = vmatpush1.msra.mxu0 0.0
  %726 = vmatprep.subr.mxu0 0.0
  %727 = vmatpush1.msra.mxu0 0.0
  %728 = vmatprep.subr.mxu0 0.0
  %729 = vmatpush1.msra.mxu0 0.0
  %730 = vmatprep.subr.mxu0 0.0
  %731 = vmatpush1.msra.mxu0 0.0
  %732 = vmatprep.subr.mxu0 0.0
  %733 = vmatpush1.msra.mxu0 0.0
  %734 = vmatprep.subr.mxu0 0.0
  %735 = vmatpush1.msra.mxu0 0.0
  %736 = vmatprep.subr.mxu0 0.0
  %737 = vmatpush1.msra.mxu0 0.0
  %738 = vmatprep.subr.mxu0 0.0
  %739 = vmatpush1.msra.mxu0 0.0
  %740 = vmatprep.subr.mxu0 0.0
  %741 = vmatpush1.msra.mxu0 0.0
  %742 = vmatprep.subr.mxu0 0.0
  %743 = vmatpush1.msra.mxu0 0.0
  %744 = vmatprep.subr.mxu0 0.0
  %745 = vmatpush1.msra.mxu0 0.0
  %746 = vmatprep.subr.mxu0 0.0
  %747 = vmatpush1.msra.mxu0 0.0
  %748 = vmatprep.subr.mxu0 0.0
  %749 = vmatpush1.msra.mxu0 0.0
  %750 = vmatprep.subr.mxu0 0.0
  %751 = vmatpush1.msra.mxu0 0.0
  %752 = vmatprep.subr.mxu0 0.0
  %753 = vmatpush1.msra.mxu0 0.0
  %754 = vmatprep.subr.mxu0 0.0
  %755 = vmatpush1.msra.mxu0 0.0
  %756 = vmatprep.subr.mxu0 0.0
  %757 = vmatpush1.msra.mxu0 0.0
  %758 = vmatprep.mubr.f32.mxu0 0.0
  %759 = vmatmul.mubr.f32.gmra.mrb[0].mxu0 %v647
  %v760 = vpop.f32.mrb[0].mxu0
  %v761 = vadd.f32 0.0, %v760
  %v762 = vpop.f32.mrb[0].mxu0
  %v763 = vadd.f32 0.0, %v762
  %764 = vmatprep.mubr.f32.mxu0 0.0
  %765 = vmatmul.mubr.f32.gmra.mrb[0].mxu0 %v650
  %v766 = vpop.f32.mrb[0].mxu0
  %v767 = vadd.f32 0.0, %v766
  %v768 = vpop.f32.mrb[0].mxu0
  %v769 = vadd.f32 0.0, %v768
  %770 = vmatprep.mubr.f32.mxu0 0.0
  %771 = vmatmul.mubr.f32.gmra.mrb[0].mxu0 %v653
  %v772 = vpop.f32.mrb[0].mxu0
  %v773 = vadd.f32 0.0, %v772
  %v774 = vpop.f32.mrb[0].mxu0
  %v775 = vadd.f32 0.0, %v774
  %776 = vmatprep.mubr.f32.mxu0 0.0
  %777 = vmatmul.mubr.f32.gmra.mrb[0].mxu0 %v656
  %v778 = vpop.f32.mrb[0].mxu0
  %v779 = vadd.f32 0.0, %v778
  %v780 = vpop.f32.mrb[0].mxu0
  %v781 = vadd.f32 0.0, %v780
  %782 = vmatprep.mubr.f32.mxu0 0.0
  %783 = vmatmul.mubr.f32.gmra.mrb[0].mxu0 %v659
  %v784 = vpop.f32.mrb[0].mxu0
  %v785 = vadd.f32 0.0, %v784
  %v786 = vpop.f32.mrb[0].mxu0
  %v787 = vadd.f32 0.0, %v786
  %788 = vmatprep.mubr.f32.mxu0 0.0
  %789 = vmatmul.mubr.f32.gmra.mrb[0].mxu0 %v662
  %v790 = vpop.f32.mrb[0].mxu0
  %v791 = vadd.f32 0.0, %v790
  %v792 = vpop.f32.mrb[0].mxu0
  %v793 = vadd.f32 0.0, %v792
  %794 = vmatprep.mubr.f32.mxu0 0.0
  %795 = vmatmul.mubr.f32.gmra.mrb[0].mxu0 %v665
  %v796 = vpop.f32.mrb[0].mxu0
  %v797 = vadd.f32 0.0, %v796
  %v798 = vpop.f32.mrb[0].mxu0
  %v799 = vadd.f32 0.0, %v798
  %800 = vmatprep.mubr.f32.mxu0 0.0
  %801 = vmatmul.mubr.f32.gmra.mrb[0].mxu0 %v668
  %v802 = vpop.f32.mrb[0].mxu0
  %v803 = vadd.f32 0.0, %v802
  %v804 = vpop.f32.mrb[0].mxu0
  %v805 = vadd.f32 0.0, %v804
  %806 = vmatprep.mubr.f32.mxu0 0.0
  %807 = vmatmul.mubr.f32.gmra.mrb[0].mxu0 %v671
  %v808 = vpop.f32.mrb[0].mxu0
  %v809 = vadd.f32 0.0, %v808
  %v810 = vpop.f32.mrb[0].mxu0
  %v811 = vadd.f32 0.0, %v810
  %812 = vmatprep.mubr.f32.mxu0 0.0
  %813 = vmatmul.mubr.f32.gmra.mrb[0].mxu0 %v674
  %v814 = vpop.f32.mrb[0].mxu0
  %v815 = vadd.f32 0.0, %v814
  %v816 = vpop.f32.mrb[0].mxu0
  %v817 = vadd.f32 0.0, %v816
  %818 = vmatprep.mubr.f32.mxu0 0.0
  %819 = vmatmul.mubr.f32.gmra.mrb[0].mxu0 %v677
  %v820 = vpop.f32.mrb[0].mxu0
  %v821 = vadd.f32 0.0, %v820
  %v822 = vpop.f32.mrb[0].mxu0
  %v823 = vadd.f32 0.0, %v822
  %824 = vmatprep.mubr.f32.mxu0 0.0
  %825 = vmatmul.mubr.f32.gmra.mrb[0].mxu0 %v680
  %v826 = vpop.f32.mrb[0].mxu0
  %v827 = vadd.f32 0.0, %v826
  %v828 = vpop.f32.mrb[0].mxu0
  %v829 = vadd.f32 0.0, %v828
  %830 = vmatprep.mubr.f32.mxu0 0.0
  %831 = vmatmul.mubr.f32.gmra.mrb[0].mxu0 %v683
  %v832 = vpop.f32.mrb[0].mxu0
  %v833 = vadd.f32 0.0, %v832
  %v834 = vpop.f32.mrb[0].mxu0
  %v835 = vadd.f32 0.0, %v834
  %836 = vmatprep.mubr.f32.mxu0 0.0
  %837 = vmatmul.mubr.f32.gmra.mrb[0].mxu0 %v686
  %v838 = vpop.f32.mrb[0].mxu0
  %v839 = vadd.f32 0.0, %v838
  %v840 = vpop.f32.mrb[0].mxu0
  %v841 = vadd.f32 0.0, %v840
  %842 = vmatprep.mubr.f32.mxu0 0.0
  %843 = vmatmul.mubr.f32.gmra.mrb[0].mxu0 %v689
  %v844 = vpop.f32.mrb[0].mxu0
  %v845 = vadd.f32 0.0, %v844
  %v846 = vpop.f32.mrb[0].mxu0
  %v847 = vadd.f32 0.0, %v846
  %848 = vmatprep.mubr.f32.mxu0 0.0
  %849 = vmatmul.mubr.f32.gmra.mrb[0].mxu0 %v692
  %v850 = vpop.f32.mrb[0].mxu0
  %v851 = vadd.f32 0.0, %v850
  %v852 = vpop.f32.mrb[0].mxu0
  %v853 = vadd.f32 0.0, %v852
  %854 = vdwg.mxu0
  %855 = vmatprep.subr.mxu0 %v576
  %856 = vmatpush1.msra.mxu0 %v575
  %857 = vmatprep.subr.mxu0 %v580
  %858 = vmatpush1.msra.mxu0 %v579
  %859 = vmatprep.subr.mxu0 %v584
  %860 = vmatpush1.msra.mxu0 %v583
  %861 = vmatprep.subr.mxu0 %v588
  %862 = vmatpush1.msra.mxu0 %v587
  %863 = vmatprep.subr.mxu0 %v592
  %864 = vmatpush1.msra.mxu0 %v591
  %865 = vmatprep.subr.mxu0 %v596
  %866 = vmatpush1.msra.mxu0 %v595
  %867 = vmatprep.subr.mxu0 %v600
  %868 = vmatpush1.msra.mxu0 %v599
  %869 = vmatprep.subr.mxu0 %v604
  %870 = vmatpush1.msra.mxu0 %v603
  %871 = vmatprep.subr.mxu0 %v608
  %872 = vmatpush1.msra.mxu0 %v607
  %873 = vmatprep.subr.mxu0 %v612
  %874 = vmatpush1.msra.mxu0 %v611
  %875 = vmatprep.subr.mxu0 %v616
  %876 = vmatpush1.msra.mxu0 %v615
  %877 = vmatprep.subr.mxu0 %v620
  %878 = vmatpush1.msra.mxu0 %v619
  %879 = vmatprep.subr.mxu0 %v624
  %880 = vmatpush1.msra.mxu0 %v623
  %881 = vmatprep.subr.mxu0 %v628
  %882 = vmatpush1.msra.mxu0 %v627
  %883 = vmatprep.subr.mxu0 0.0
  %884 = vmatpush1.msra.mxu0 0.0
  %885 = vmatprep.subr.mxu0 0.0
  %886 = vmatpush1.msra.mxu0 0.0
  %887 = vmatprep.subr.mxu0 0.0
  %888 = vmatpush1.msra.mxu0 0.0
  %889 = vmatprep.subr.mxu0 0.0
  %890 = vmatpush1.msra.mxu0 0.0
  %891 = vmatprep.subr.mxu0 0.0
  %892 = vmatpush1.msra.mxu0 0.0
  %893 = vmatprep.subr.mxu0 0.0
  %894 = vmatpush1.msra.mxu0 0.0
  %895 = vmatprep.subr.mxu0 0.0
  %896 = vmatpush1.msra.mxu0 0.0
  %897 = vmatprep.subr.mxu0 0.0
  %898 = vmatpush1.msra.mxu0 0.0
  %899 = vmatprep.subr.mxu0 0.0
  %900 = vmatpush1.msra.mxu0 0.0
  %901 = vmatprep.subr.mxu0 0.0
  %902 = vmatpush1.msra.mxu0 0.0
  %903 = vmatprep.subr.mxu0 0.0
  %904 = vmatpush1.msra.mxu0 0.0
  %905 = vmatprep.subr.mxu0 0.0
  %906 = vmatpush1.msra.mxu0 0.0
  %907 = vmatprep.subr.mxu0 0.0
  %908 = vmatpush1.msra.mxu0 0.0
  %909 = vmatprep.subr.mxu0 0.0
  %910 = vmatpush1.msra.mxu0 0.0
  %911 = vmatprep.subr.mxu0 0.0
  %912 = vmatpush1.msra.mxu0 0.0
  %913 = vmatprep.subr.mxu0 0.0
  %914 = vmatpush1.msra.mxu0 0.0
  %915 = vmatprep.subr.mxu0 0.0
  %916 = vmatpush1.msra.mxu0 0.0
  %917 = vmatprep.subr.mxu0 0.0
  %918 = vmatpush1.msra.mxu0 0.0
  %919 = vmatprep.mubr.f32.mxu0 0.0
  %920 = vmatmul.mubr.f32.gmra.mrb[0].mxu0 %v647
  %v921 = vpop.f32.mrb[0].mxu0
  %v922 = vadd.f32 0.0, %v921
  %v923 = vpop.f32.mrb[0].mxu0
  %v924 = vadd.f32 0.0, %v923
  %925 = vmatprep.mubr.f32.mxu0 0.0
  %926 = vmatmul.mubr.f32.gmra.mrb[0].mxu0 %v650
  %v927 = vpop.f32.mrb[0].mxu0
  %v928 = vadd.f32 0.0, %v927
  %v929 = vpop.f32.mrb[0].mxu0
  %v930 = vadd.f32 0.0, %v929
  %931 = vmatprep.mubr.f32.mxu0 0.0
  %932 = vmatmul.mubr.f32.gmra.mrb[0].mxu0 %v653
  %v933 = vpop.f32.mrb[0].mxu0
  %v934 = vadd.f32 0.0, %v933
  %v935 = vpop.f32.mrb[0].mxu0
  %v936 = vadd.f32 0.0, %v935
  %937 = vmatprep.mubr.f32.mxu0 0.0
  %938 = vmatmul.mubr.f32.gmra.mrb[0].mxu0 %v656
  %v939 = vpop.f32.mrb[0].mxu0
  %v940 = vadd.f32 0.0, %v939
  %v941 = vpop.f32.mrb[0].mxu0
  %v942 = vadd.f32 0.0, %v941
  %943 = vmatprep.mubr.f32.mxu0 0.0
  %944 = vmatmul.mubr.f32.gmra.mrb[0].mxu0 %v659
  %v945 = vpop.f32.mrb[0].mxu0
  %v946 = vadd.f32 0.0, %v945
  %v947 = vpop.f32.mrb[0].mxu0
  %v948 = vadd.f32 0.0, %v947
  %949 = vmatprep.mubr.f32.mxu0 0.0
  %950 = vmatmul.mubr.f32.gmra.mrb[0].mxu0 %v662
  %v951 = vpop.f32.mrb[0].mxu0
  %v952 = vadd.f32 0.0, %v951
  %v953 = vpop.f32.mrb[0].mxu0
  %v954 = vadd.f32 0.0, %v953
  %955 = vmatprep.mubr.f32.mxu0 0.0
  %956 = vmatmul.mubr.f32.gmra.mrb[0].mxu0 %v665
  %v957 = vpop.f32.mrb[0].mxu0
  %v958 = vadd.f32 0.0, %v957
  %v959 = vpop.f32.mrb[0].mxu0
  %v960 = vadd.f32 0.0, %v959
  %961 = vmatprep.mubr.f32.mxu0 0.0
  %962 = vmatmul.mubr.f32.gmra.mrb[0].mxu0 %v668
  %v963 = vpop.f32.mrb[0].mxu0
  %v964 = vadd.f32 0.0, %v963
  %v965 = vpop.f32.mrb[0].mxu0
  %v966 = vadd.f32 0.0, %v965
  %967 = vmatprep.mubr.f32.mxu0 0.0
  %968 = vmatmul.mubr.f32.gmra.mrb[0].mxu0 %v671
  %v969 = vpop.f32.mrb[0].mxu0
  %v970 = vadd.f32 0.0, %v969
  %v971 = vpop.f32.mrb[0].mxu0
  %v972 = vadd.f32 0.0, %v971
  %973 = vmatprep.mubr.f32.mxu0 0.0
  %974 = vmatmul.mubr.f32.gmra.mrb[0].mxu0 %v674
  %v975 = vpop.f32.mrb[0].mxu0
  %v976 = vadd.f32 0.0, %v975
  %v977 = vpop.f32.mrb[0].mxu0
  %v978 = vadd.f32 0.0, %v977
  %979 = vmatprep.mubr.f32.mxu0 0.0
  %980 = vmatmul.mubr.f32.gmra.mrb[0].mxu0 %v677
  %v981 = vpop.f32.mrb[0].mxu0
  %v982 = vadd.f32 0.0, %v981
  %v983 = vpop.f32.mrb[0].mxu0
  %v984 = vadd.f32 0.0, %v983
  %985 = vmatprep.mubr.f32.mxu0 0.0
  %986 = vmatmul.mubr.f32.gmra.mrb[0].mxu0 %v680
  %v987 = vpop.f32.mrb[0].mxu0
  %v988 = vadd.f32 0.0, %v987
  %v989 = vpop.f32.mrb[0].mxu0
  %v990 = vadd.f32 0.0, %v989
  %991 = vmatprep.mubr.f32.mxu0 0.0
  %992 = vmatmul.mubr.f32.gmra.mrb[0].mxu0 %v683
  %v993 = vpop.f32.mrb[0].mxu0
  %v994 = vadd.f32 0.0, %v993
  %v995 = vpop.f32.mrb[0].mxu0
  %v996 = vadd.f32 0.0, %v995
  %997 = vmatprep.mubr.f32.mxu0 0.0
  %998 = vmatmul.mubr.f32.gmra.mrb[0].mxu0 %v686
  %v999 = vpop.f32.mrb[0].mxu0
  %v1000 = vadd.f32 0.0, %v999
  %v1001 = vpop.f32.mrb[0].mxu0
  %v1002 = vadd.f32 0.0, %v1001
  %1003 = vmatprep.mubr.f32.mxu0 0.0
  %1004 = vmatmul.mubr.f32.gmra.mrb[0].mxu0 %v689
  %v1005 = vpop.f32.mrb[0].mxu0
  %v1006 = vadd.f32 0.0, %v1005
  %v1007 = vpop.f32.mrb[0].mxu0
  %v1008 = vadd.f32 0.0, %v1007
  %1009 = vmatprep.mubr.f32.mxu0 0.0
  %1010 = vmatmul.mubr.f32.gmra.mrb[0].mxu0 %v692
  %v1011 = vpop.f32.mrb[0].mxu0
  %v1012 = vadd.f32 0.0, %v1011
  %v1013 = vpop.f32.mrb[0].mxu0
  %v1014 = vadd.f32 0.0, %v1013
  %1015 = vdwg.mxu0
  %v1016 = vmax.f32 %v761, 0.0
  %v1017 = vmax.f32 %v763, 0.0
  %v1018 = vmax.f32 %v922, 0.0
  %v1019 = vmax.f32 %v924, 0.0
  %v1020 = vmax.f32 %v767, 0.0
  %v1021 = vmax.f32 %v769, 0.0
  %v1022 = vmax.f32 %v928, 0.0
  %v1023 = vmax.f32 %v930, 0.0
  %v1024 = vmax.f32 %v773, 0.0
  %v1025 = vmax.f32 %v775, 0.0
  %v1026 = vmax.f32 %v934, 0.0
  %v1027 = vmax.f32 %v936, 0.0
  %v1028 = vmax.f32 %v779, 0.0
  %v1029 = vmax.f32 %v781, 0.0
  %v1030 = vmax.f32 %v940, 0.0
  %v1031 = vmax.f32 %v942, 0.0
  %v1032 = vmax.f32 %v785, 0.0
  %v1033 = vmax.f32 %v787, 0.0
  %v1034 = vmax.f32 %v946, 0.0
  %v1035 = vmax.f32 %v948, 0.0
  %v1036 = vmax.f32 %v791, 0.0
  %v1037 = vmax.f32 %v793, 0.0
  %v1038 = vmax.f32 %v952, 0.0
  %v1039 = vmax.f32 %v954, 0.0
  %v1040 = vmax.f32 %v797, 0.0
  %v1041 = vmax.f32 %v799, 0.0
  %v1042 = vmax.f32 %v958, 0.0
  %v1043 = vmax.f32 %v960, 0.0
  %v1044 = vmax.f32 %v803, 0.0
  %v1045 = vmax.f32 %v805, 0.0
  %v1046 = vmax.f32 %v964, 0.0
  %v1047 = vmax.f32 %v966, 0.0
  %v1048 = vmax.f32 %v809, 0.0
  %v1049 = vmax.f32 %v811, 0.0
  %v1050 = vmax.f32 %v970, 0.0
  %v1051 = vmax.f32 %v972, 0.0
  %v1052 = vmax.f32 %v815, 0.0
  %v1053 = vmax.f32 %v817, 0.0
  %v1054 = vmax.f32 %v976, 0.0
  %v1055 = vmax.f32 %v978, 0.0
  %v1056 = vmax.f32 %v821, 0.0
  %v1057 = vmax.f32 %v823, 0.0
  %v1058 = vmax.f32 %v982, 0.0
  %v1059 = vmax.f32 %v984, 0.0
  %v1060 = vmax.f32 %v827, 0.0
  %v1061 = vmax.f32 %v829, 0.0
  %v1062 = vmax.f32 %v988, 0.0
  %v1063 = vmax.f32 %v990, 0.0
  %v1064 = vmax.f32 %v833, 0.0
  %v1065 = vmax.f32 %v835, 0.0
  %v1066 = vmax.f32 %v994, 0.0
  %v1067 = vmax.f32 %v996, 0.0
  %v1068 = vmax.f32 %v839, 0.0
  %v1069 = vmax.f32 %v841, 0.0
  %v1070 = vmax.f32 %v1000, 0.0
  %v1071 = vmax.f32 %v1002, 0.0
  %v1072 = vmax.f32 %v845, 0.0
  %v1073 = vmax.f32 %v847, 0.0
  %v1074 = vmax.f32 %v1006, 0.0
  %v1075 = vmax.f32 %v1008, 0.0
  %v1076 = vmax.f32 %v851, 0.0
  %v1077 = vmax.f32 %v853, 0.0
  %v1078 = vmax.f32 %v1012, 0.0
  %v1079 = vmax.f32 %v1014, 0.0
  %v1080 = vld [vmem:[%s4] sm:$0x1]
  %v1081 = vld [vmem:[#allocation2] sm:$0x1]
  %1083 = vset.pattern.permute.xlu0 0
  %1084 = vperm.xlu0 %1083, %v1081
  %v1085 = vpop.permute.xlu0 %1084
  %v1087 = vlaneseq
  %v1088 = vshrl.u32 %v1087, 7
  %v1089 = vsub.s32 0, %v1088
  %v1090 = vrot.slane %v1085, %v1089
  %1091 = vmatprep.subr.mxu0 %v1017
  %1092 = vmatpush1.msra.mxu0 %v1016
  %1093 = vmatprep.subr.mxu0 %v1021
  %1094 = vmatpush1.msra.mxu0 %v1020
  %1095 = vmatprep.subr.mxu0 %v1025
  %1096 = vmatpush1.msra.mxu0 %v1024
  %1097 = vmatprep.subr.mxu0 %v1029
  %1098 = vmatpush1.msra.mxu0 %v1028
  %1099 = vmatprep.subr.mxu0 %v1033
  %1100 = vmatpush1.msra.mxu0 %v1032
  %1101 = vmatprep.subr.mxu0 %v1037
  %1102 = vmatpush1.msra.mxu0 %v1036
  %1103 = vmatprep.subr.mxu0 %v1041
  %1104 = vmatpush1.msra.mxu0 %v1040
  %1105 = vmatprep.subr.mxu0 %v1045
  %1106 = vmatpush1.msra.mxu0 %v1044
  %1107 = vmatprep.subr.mxu0 %v1049
  %1108 = vmatpush1.msra.mxu0 %v1048
  %1109 = vmatprep.subr.mxu0 %v1053
  %1110 = vmatpush1.msra.mxu0 %v1052
  %1111 = vmatprep.subr.mxu0 %v1057
  %1112 = vmatpush1.msra.mxu0 %v1056
  %1113 = vmatprep.subr.mxu0 %v1061
  %1114 = vmatpush1.msra.mxu0 %v1060
  %1115 = vmatprep.subr.mxu0 %v1065
  %1116 = vmatpush1.msra.mxu0 %v1064
  %1117 = vmatprep.subr.mxu0 %v1069
  %1118 = vmatpush1.msra.mxu0 %v1068
  %1119 = vmatprep.subr.mxu0 %v1073
  %1120 = vmatpush1.msra.mxu0 %v1072
  %1121 = vmatprep.subr.mxu0 %v1077
  %1122 = vmatpush1.msra.mxu0 %v1076
  %1123 = vmatprep.subr.mxu0 0.0
  %1124 = vmatpush1.msra.mxu0 0.0
  %1125 = vmatprep.subr.mxu0 0.0
  %1126 = vmatpush1.msra.mxu0 0.0
  %1127 = vmatprep.subr.mxu0 0.0
  %1128 = vmatpush1.msra.mxu0 0.0
  %1129 = vmatprep.subr.mxu0 0.0
  %1130 = vmatpush1.msra.mxu0 0.0
  %1131 = vmatprep.subr.mxu0 0.0
  %1132 = vmatpush1.msra.mxu0 0.0
  %1133 = vmatprep.subr.mxu0 0.0
  %1134 = vmatpush1.msra.mxu0 0.0
  %1135 = vmatprep.subr.mxu0 0.0
  %1136 = vmatpush1.msra.mxu0 0.0
  %1137 = vmatprep.subr.mxu0 0.0
  %1138 = vmatpush1.msra.mxu0 0.0
  %1139 = vmatprep.subr.mxu0 0.0
  %1140 = vmatpush1.msra.mxu0 0.0
  %1141 = vmatprep.subr.mxu0 0.0
  %1142 = vmatpush1.msra.mxu0 0.0
  %1143 = vmatprep.subr.mxu0 0.0
  %1144 = vmatpush1.msra.mxu0 0.0
  %1145 = vmatprep.subr.mxu0 0.0
  %1146 = vmatpush1.msra.mxu0 0.0
  %1147 = vmatprep.subr.mxu0 0.0
  %1148 = vmatpush1.msra.mxu0 0.0
  %1149 = vmatprep.subr.mxu0 0.0
  %1150 = vmatpush1.msra.mxu0 0.0
  %1151 = vmatprep.subr.mxu0 0.0
  %1152 = vmatpush1.msra.mxu0 0.0
  %1153 = vmatprep.subr.mxu0 0.0
  %1154 = vmatpush1.msra.mxu0 0.0
  %1155 = vmatprep.mubr.f32.mxu0 0.0
  %1156 = vmatmul.mubr.f32.gmra.mrb[0].mxu0 %v1080
  %v1157 = vpop.f32.mrb[0].mxu0
  %v1158 = vadd.f32 %v1090, %v1157
  %v1159 = vpop.f32.mrb[0].mxu0
  %v1160 = vadd.f32 %v1090, %v1159
  %1161 = vdwg.mxu0
  %1162 = vmatprep.subr.mxu0 %v1019
  %1163 = vmatpush1.msra.mxu0 %v1018
  %1164 = vmatprep.subr.mxu0 %v1023
  %1165 = vmatpush1.msra.mxu0 %v1022
  %1166 = vmatprep.subr.mxu0 %v1027
  %1167 = vmatpush1.msra.mxu0 %v1026
  %1168 = vmatprep.subr.mxu0 %v1031
  %1169 = vmatpush1.msra.mxu0 %v1030
  %1170 = vmatprep.subr.mxu0 %v1035
  %1171 = vmatpush1.msra.mxu0 %v1034
  %1172 = vmatprep.subr.mxu0 %v1039
  %1173 = vmatpush1.msra.mxu0 %v1038
  %1174 = vmatprep.subr.mxu0 %v1043
  %1175 = vmatpush1.msra.mxu0 %v1042
  %1176 = vmatprep.subr.mxu0 %v1047
  %1177 = vmatpush1.msra.mxu0 %v1046
  %1178 = vmatprep.subr.mxu0 %v1051
  %1179 = vmatpush1.msra.mxu0 %v1050
  %1180 = vmatprep.subr.mxu0 %v1055
  %1181 = vmatpush1.msra.mxu0 %v1054
  %1182 = vmatprep.subr.mxu0 %v1059
  %1183 = vmatpush1.msra.mxu0 %v1058
  %1184 = vmatprep.subr.mxu0 %v1063
  %1185 = vmatpush1.msra.mxu0 %v1062
  %1186 = vmatprep.subr.mxu0 %v1067
  %1187 = vmatpush1.msra.mxu0 %v1066
  %1188 = vmatprep.subr.mxu0 %v1071
  %1189 = vmatpush1.msra.mxu0 %v1070
  %1190 = vmatprep.subr.mxu0 %v1075
  %1191 = vmatpush1.msra.mxu0 %v1074
  %1192 = vmatprep.subr.mxu0 %v1079
  %1193 = vmatpush1.msra.mxu0 %v1078
  %1194 = vmatprep.subr.mxu0 0.0
  %1195 = vmatpush1.msra.mxu0 0.0
  %1196 = vmatprep.subr.mxu0 0.0
  %1197 = vmatpush1.msra.mxu0 0.0
  %1198 = vmatprep.subr.mxu0 0.0
  %1199 = vmatpush1.msra.mxu0 0.0
  %1200 = vmatprep.subr.mxu0 0.0
  %1201 = vmatpush1.msra.mxu0 0.0
  %1202 = vmatprep.subr.mxu0 0.0
  %1203 = vmatpush1.msra.mxu0 0.0
  %1204 = vmatprep.subr.mxu0 0.0
  %1205 = vmatpush1.msra.mxu0 0.0
  %1206 = vmatprep.subr.mxu0 0.0
  %1207 = vmatpush1.msra.mxu0 0.0
  %1208 = vmatprep.subr.mxu0 0.0
  %1209 = vmatpush1.msra.mxu0 0.0
  %1210 = vmatprep.subr.mxu0 0.0
  %1211 = vmatpush1.msra.mxu0 0.0
  %1212 = vmatprep.subr.mxu0 0.0
  %1213 = vmatpush1.msra.mxu0 0.0
  %1214 = vmatprep.subr.mxu0 0.0
  %1215 = vmatpush1.msra.mxu0 0.0
  %1216 = vmatprep.subr.mxu0 0.0
  %1217 = vmatpush1.msra.mxu0 0.0
  %1218 = vmatprep.subr.mxu0 0.0
  %1219 = vmatpush1.msra.mxu0 0.0
  %1220 = vmatprep.subr.mxu0 0.0
  %1221 = vmatpush1.msra.mxu0 0.0
  %1222 = vmatprep.subr.mxu0 0.0
  %1223 = vmatpush1.msra.mxu0 0.0
  %1224 = vmatprep.subr.mxu0 0.0
  %1225 = vmatpush1.msra.mxu0 0.0
  %1226 = vmatprep.mubr.f32.mxu0 0.0
  %1227 = vmatmul.mubr.f32.gmra.mrb[0].mxu0 %v1080
  %v1228 = vpop.f32.mrb[0].mxu0
  %v1229 = vadd.f32 %v1090, %v1228
  %v1230 = vpop.f32.mrb[0].mxu0
  %v1231 = vadd.f32 %v1090, %v1230
  %1232 = vdwg.mxu0
  %v1237 = vcombine.low %v1158, %v1160
  %v1238 = vcombine.low %v1229, %v1231
  %v1240 = vunpack.c.l.s4 1966171168
  %v1241 = vunpack.c.0.s8 %v1240
  %v1242 = vlaneseq
  %v1243 = vshrl.u32 %v1242, 7
  %v1244 = vsub.s32 %v1241, %v1243
  %v1245 = vrot.slane %v1237, %v1244
  %v1247 = vunpack.c.l.s4 1966171168
  %v1248 = vunpack.c.0.s8 %v1247
  %v1249 = vlaneseq
  %v1250 = vshrl.u32 %v1249, 7
  %v1251 = vsub.s32 %v1248, %v1250
  %v1252 = vrot.slane %v1238, %v1251
  %v1253 = vcombine.low %v1245, %v1252
  %v1255 = vunpack.c.l.s4 1966171168
  %v1256 = vunpack.c.0.s8 %v1255
  %v1257 = vlaneseq
  %v1258 = vshrl.u32 %v1257, 7
  %v1259 = vsub.s32 %v1256, %v1258
  %v1260 = vrot.slane %v1253, %v1259
  %v1262 = vlaneseq
  %vm1263 = vcmp.ge.s32.totalorder %v1262, 0
  %vm1264 = vcmp.lt.s32.totalorder %v1262, 512
  %vm1265 = vmand %vm1263, %vm1264
  %1266 = vst.msk [vmem:[%s6] sm:$0xf] %vm1265, %v1260
  // Predicated region
  $region26: #{recommendation_forward.1} parent=0 // pred_check
    _
  $region27: #{recommendation_forward.1} parent=0 // pred_check_branch
    %1268 = sbr.rel (0) target = $region29
  $region28: #{recommendation_forward.1} parent=0 // pred_region
    _
  $region29: #{recommendation_forward.1} parent=0 // pred_fallthru
    _
  // Predicated region
  $region30: #{recommendation_forward.1} parent=0 // pred_check
    _
  $region31: #{recommendation_forward.1} parent=0 // pred_check_branch
    %1270 = sbr.rel (0) target = $region33
  $region32: #{recommendation_forward.1} parent=0 // pred_region
    _
  $region33: #{recommendation_forward.1} parent=0 // pred_fallthru
    _

</llo_original>
